<compile_context>
chip_gen: v7x
topology: tpu7x:2x2x1
jax: 0.10.0
libtpu: 0.0.40
codegen_flags: <defaults>
</compile_context>

<pallas_src>
import jax
import jax.numpy as jnp
import numpy as np
from jax.experimental import pallas as pl
from jax.experimental.pallas import tpu as pltpu


# --------------------------------------------------------------------------
# Fused Pallas kernel
# --------------------------------------------------------------------------
def _fused_view_kernel(x_ref, we_ref, be_ref, wg_ref, bg_ref,
                       osc_ref, obi_ref, o_ref):
    # Encoder with the input channel-affine pre-folded into we/be:
    #   w1 = (x * in_scale + in_bias) @ W_enc + b_enc            (MXU, f32 acc)
    w1 = (jnp.dot(x_ref[...], we_ref[...], preferred_element_type=jnp.float32)
          + be_ref[...])
    # Generator with the 0.7-truncation trick pre-folded into wg/bg:
    #   pre = (trunc + 0.7*(w1 - trunc)) @ W_gen + b_gen          (MXU, f32 acc)
    pre = (jnp.dot(w1, wg_ref[...], preferred_element_type=jnp.float32)
           + bg_ref[...])
    # tanh (EUP) + output channel-affine (lane-dense (1, C*H*W) rows, VPU).
    o_ref[...] = jnp.tanh(pre) * osc_ref[...] + obi_ref[...]


def _vmem():
    return pl.BlockSpec(memory_space=pltpu.MemorySpace.VMEM)


# --------------------------------------------------------------------------
# Transform composition (torchvision Normalize((x-m)/s), op1 then op2)
# --------------------------------------------------------------------------
def _compose_normalize(m1, s1, m2, s2):
    m1, s1, m2, s2 = (jnp.asarray(a, jnp.float32) for a in (m1, s1, m2, s2))
    sc1, b1 = 1.0 / s1, -m1 / s1
    sc2, b2 = 1.0 / s2, -m2 / s2
    return sc1 * sc2, b1 * sc2 + b2


CIFAR_MEAN = jnp.array([0.4914, 0.4822, 0.4465], jnp.float32)
CIFAR_STD = jnp.array([0.2023, 0.1994, 0.201], jnp.float32)

# gan_input_transform  = Normalize(-mean/std, 1/std) then Normalize(0.5, 0.5)
_IN_SCALE, _IN_BIAS = _compose_normalize(
    -CIFAR_MEAN / CIFAR_STD, 1.0 / CIFAR_STD,
    jnp.array([0.5, 0.5, 0.5]), jnp.array([0.5, 0.5, 0.5]))
# gan_output_transform = Normalize(-1, 2) then Normalize(mean, std)
_OUT_SCALE, _OUT_BIAS = _compose_normalize(
    jnp.array([-1.0, -1.0, -1.0]), jnp.array([2.0, 2.0, 2.0]),
    CIFAR_MEAN, CIFAR_STD)


# --------------------------------------------------------------------------
# One-time parameter folding (zero per-call cost)
# --------------------------------------------------------------------------
def prepare_fused_params(raw, img_shape):
    C, H, W = img_shape
    hw = H * W
    # NCHW flatten => per-channel values repeat H*W times along the flat axis.
    in_scale_flat = jnp.repeat(_IN_SCALE, hw)            # (C*H*W,)
    in_bias_flat = jnp.repeat(_IN_BIAS, hw)
    w_enc_f = in_scale_flat[:, None] * raw["w_enc"]
    b_enc_f = raw["b_enc"] + in_bias_flat[None, :] @ raw["w_enc"]
    w_gen_f = 0.7 * raw["w_gen"]
    b_gen_f = raw["b_gen"] + 0.3 * (raw["gan_trunc"] @ raw["w_gen"])
    out_scale_row = jnp.repeat(_OUT_SCALE, hw)[None, :]  # (1, C*H*W) lane-dense
    out_bias_row = jnp.repeat(_OUT_BIAS, hw)[None, :]
    return {
        "w_enc": w_enc_f.astype(jnp.float32),
        "b_enc": b_enc_f.astype(jnp.float32),
        "w_gen": w_gen_f.astype(jnp.float32),
        "b_gen": b_gen_f.astype(jnp.float32),
        "out_scale": out_scale_row.astype(jnp.float32),
        "out_bias": out_bias_row.astype(jnp.float32),
    }


# --------------------------------------------------------------------------
# Forward
# --------------------------------------------------------------------------
@jax.jit
def view_generator_forward(x, fp):
    """ViewGenerator.forward (idinvert=0 / boundary=0 path), single fused kernel."""
    B, C, H, W = x.shape
    D = C * H * W
    x_flat = x.reshape(B, D).astype(jnp.float32)
    out = pl.pallas_call(
        _fused_view_kernel,
        out_shape=jax.ShapeDtypeStruct((B, D), jnp.float32),
        in_specs=[_vmem()] * 7,
        out_specs=_vmem(),
    )(x_flat, fp["w_enc"], fp["b_enc"], fp["w_gen"], fp["b_gen"],
      fp["out_scale"], fp["out_bias"])
    return out.reshape(B, C, H, W)


# Pure-JAX reference of the unfused semantics (for the tolerance check).
def _reference_forward(x, raw):
    B, C, H, W = x.shape
    xx = x * _IN_SCALE.reshape(1, C, 1, 1) + _IN_BIAS.reshape(1, C, 1, 1)
    w0 = xx.reshape(B, -1) @ raw["w_enc"] + raw["b_enc"]
    w1 = w0
    w_t = raw["gan_trunc"] + 0.7 * (w1 - raw["gan_trunc"])
    x_rec = jnp.tanh(w_t @ raw["w_gen"] + raw["b_gen"]).reshape(B, C, H, W)
    return (x_rec * _OUT_SCALE.reshape(1, C, 1, 1)
            + _OUT_BIAS.reshape(1, C, 1, 1))


# --------------------------------------------------------------------------
# Main
# --------------------------------------------------------------------------
if __name__ == "__main__":
    key = jax.random.PRNGKey(0)
    B, C, H, W = 8, 3, 16, 16       # CIFAR-style 3-channel; B=8 fills sublanes
    LATENT = 32
    D = C * H * W                   # 768 = 6 * 128 lanes (lane-dense output)

    k_x, k_we, k_be, k_wg, k_bg, k_tr = jax.random.split(key, 6)
    x = jax.random.uniform(k_x, (B, C, H, W), jnp.float32)

    # Deterministic synthetic parameters (stand-ins for gan_encoder /
    # gan_generator / mean_latent buffer of the real StyleGAN2 pipeline).
    raw_params = {
        "w_enc": jax.random.normal(k_we, (D, LATENT), jnp.float32) * 0.02,
        "b_enc": jax.random.normal(k_be, (1, LATENT), jnp.float32) * 0.02,
        "w_gen": jax.random.normal(k_wg, (LATENT, D), jnp.float32) * 0.02,
        "b_gen": jax.random.normal(k_bg, (1, D), jnp.float32) * 0.02,
        "gan_trunc": jax.random.normal(k_tr, (1, LATENT), jnp.float32) * 0.02,
    }
    fused_params = prepare_fused_params(raw_params, (C, H, W))

    out = view_generator_forward(x, fused_params)
    jax.block_until_ready(out)
    assert out.shape == (B, C, H, W) and out.dtype == jnp.float32

    # Verify the weight-folded fused kernel against the unfused semantics.
    ref = _reference_forward(x, raw_params)
    np.testing.assert_allclose(np.asarray(out), np.asarray(ref),
                               rtol=1e-4, atol=1e-4)
    print("KERNEL_OK")
</pallas_src>

<mosaic_0001>
module attributes {stable_mosaic.version = 11 : i64} {
  func.func @_fused_view_kernel(%arg0: memref<8x768xf32, #tpu.memory_space<vmem>>, %arg1: memref<768x32xf32, #tpu.memory_space<vmem>>, %arg2: memref<1x32xf32, #tpu.memory_space<vmem>>, %arg3: memref<32x768xf32, #tpu.memory_space<vmem>>, %arg4: memref<1x768xf32, #tpu.memory_space<vmem>>, %arg5: memref<1x768xf32, #tpu.memory_space<vmem>>, %arg6: memref<1x768xf32, #tpu.memory_space<vmem>>, %arg7: memref<8x768xf32, #tpu.memory_space<vmem>>) attributes {dimension_semantics = [], scalar_prefetch = 0 : i64, scratch_operands = 0 : i64, tpu.core_type = #tpu.core_type<tc>} {
    %c0 = arith.constant 0 : index
    %c0_0 = arith.constant 0 : index
    %0 = vector.load %arg0[%c0, %c0_0] : memref<8x768xf32, #tpu.memory_space<vmem>>, vector<8x768xf32>
    %c0_1 = arith.constant 0 : index
    %c0_2 = arith.constant 0 : index
    %1 = vector.load %arg1[%c0_1, %c0_2] : memref<768x32xf32, #tpu.memory_space<vmem>>, vector<768x32xf32>
    %cst = arith.constant dense<0.000000e+00> : vector<8x32xf32>
    %2 = tpu.matmul %0, %1, %cst {dimension_numbers = #tpu.dot_dimension_numbers<[1], [0], [0], [1], [0, 0, 1, 1], [], []>} : vector<8x768xf32>, vector<768x32xf32>, vector<8x32xf32> -> vector<8x32xf32>
    %c0_3 = arith.constant 0 : index
    %c0_4 = arith.constant 0 : index
    %3 = vector.load %arg2[%c0_3, %c0_4] : memref<1x32xf32, #tpu.memory_space<vmem>>, vector<1x32xf32>
    %4 = vector.broadcast %3 : vector<1x32xf32> to vector<8x32xf32>
    %5 = arith.addf %2, %4 : vector<8x32xf32>
    %c0_5 = arith.constant 0 : index
    %c0_6 = arith.constant 0 : index
    %6 = vector.load %arg3[%c0_5, %c0_6] : memref<32x768xf32, #tpu.memory_space<vmem>>, vector<32x768xf32>
    %cst_7 = arith.constant dense<0.000000e+00> : vector<8x768xf32>
    %7 = tpu.matmul %5, %6, %cst_7 {dimension_numbers = #tpu.dot_dimension_numbers<[1], [0], [0], [1], [0, 0, 1, 1], [], []>} : vector<8x32xf32>, vector<32x768xf32>, vector<8x768xf32> -> vector<8x768xf32>
    %c0_8 = arith.constant 0 : index
    %c0_9 = arith.constant 0 : index
    %8 = vector.load %arg4[%c0_8, %c0_9] : memref<1x768xf32, #tpu.memory_space<vmem>>, vector<1x768xf32>
    %9 = vector.broadcast %8 : vector<1x768xf32> to vector<8x768xf32>
    %10 = arith.addf %7, %9 : vector<8x768xf32>
    %11 = math.tanh %10 : vector<8x768xf32>
    %c0_10 = arith.constant 0 : index
    %c0_11 = arith.constant 0 : index
    %12 = vector.load %arg5[%c0_10, %c0_11] : memref<1x768xf32, #tpu.memory_space<vmem>>, vector<1x768xf32>
    %13 = vector.broadcast %12 : vector<1x768xf32> to vector<8x768xf32>
    %14 = arith.mulf %11, %13 : vector<8x768xf32>
    %c0_12 = arith.constant 0 : index
    %c0_13 = arith.constant 0 : index
    %15 = vector.load %arg6[%c0_12, %c0_13] : memref<1x768xf32, #tpu.memory_space<vmem>>, vector<1x768xf32>
    %16 = vector.broadcast %15 : vector<1x768xf32> to vector<8x768xf32>
    %17 = arith.addf %14, %16 : vector<8x768xf32>
    %c0_14 = arith.constant 0 : index
    %c0_15 = arith.constant 0 : index
    %18 = vector.load %arg7[%c0_14, %c0_15] : memref<8x768xf32, #tpu.memory_space<vmem>>, vector<8x768xf32>
    tpu.vector_store %arg7[%c0_14, %c0_15], %17 {strides = array<i32>} : memref<8x768xf32, #tpu.memory_space<vmem>>, vector<8x768xf32>,
    return
  }
}

</mosaic_0001>

<llo_original>
// kernel: view_generator_forward.1
$region0: #{view_generator_forward.1}
  #allocation0 [shape = 'u32[]', space=smem, size = 0x4, offset = 0x4, fixed_abs, tag = 'smem constant byte address 0x4 - core index']
  #allocation1 [shape = 'u32[144,128]{1,0:T(1,128)}', space=vmem, size = 0x12000, scoped, tag = 'internal scratch']
  %s0 = inlined_call_operand.vmem [shape: f32[8,768], index: 0, kind: input, shape index: {}]
  %s1 = inlined_call_operand.vmem [shape: f32[768,32], index: 1, kind: input, shape index: {}]
  %s2 = inlined_call_operand.vmem [shape: f32[1,32], index: 2, kind: input, shape index: {}]
  %s3 = inlined_call_operand.vmem [shape: f32[32,768], index: 3, kind: input, shape index: {}]
  %s4 = inlined_call_operand.vmem [shape: f32[1,768], index: 4, kind: input, shape index: {}]
  %s5 = inlined_call_operand.vmem [shape: f32[1,768], index: 5, kind: input, shape index: {}]
  %s6 = inlined_call_operand.vmem [shape: f32[1,768], index: 6, kind: input, shape index: {}]
  %s7 = inlined_call_operand.vmem [shape: f32[8,768], index: 7, kind: output, shape index: {}]
  %s8 = sld [smem:[#allocation0]]
  $region38: #{view_generator_forward.1} parent=0
    _
  %s10 = ssub.s32 1, %s8
  %s11 = scalar_select 0, %s10, %s8
  // Predicated region
  $region2: #{view_generator_forward.1} parent=0 // pred_check
    _
  $region3: #{view_generator_forward.1} parent=0 // pred_check_branch
    %13 = sbr.rel (0) target = $region5
  $region4: #{view_generator_forward.1} parent=0 // pred_region
    _
  $region5: #{view_generator_forward.1} parent=0 // pred_fallthru
    _
  // Predicated region
  $region6: #{view_generator_forward.1} parent=0 // pred_check
    _
  $region7: #{view_generator_forward.1} parent=0 // pred_check_branch
    %15 = sbr.rel (0) target = $region9
  $region8: #{view_generator_forward.1} parent=0 // pred_region
    _
  $region9: #{view_generator_forward.1} parent=0 // pred_fallthru
    _
  // Predicated region
  $region10: #{view_generator_forward.1} parent=0 // pred_check
    _
  $region11: #{view_generator_forward.1} parent=0 // pred_check_branch
    %17 = sbr.rel (0) target = $region13
  $region12: #{view_generator_forward.1} parent=0 // pred_region
    _
  $region13: #{view_generator_forward.1} parent=0 // pred_fallthru
    _
  // Predicated region
  $region14: #{view_generator_forward.1} parent=0 // pred_check
    _
  $region15: #{view_generator_forward.1} parent=0 // pred_check_branch
    %19 = sbr.rel (0) target = $region17
  $region16: #{view_generator_forward.1} parent=0 // pred_region
    _
  $region17: #{view_generator_forward.1} parent=0 // pred_fallthru
    _
  // Predicated region
  $region18: #{view_generator_forward.1} parent=0 // pred_check
    _
  $region19: #{view_generator_forward.1} parent=0 // pred_check_branch
    %21 = sbr.rel (0) target = $region21
  $region20: #{view_generator_forward.1} parent=0 // pred_region
    _
  $region21: #{view_generator_forward.1} parent=0 // pred_fallthru
    _
  // Predicated region
  $region22: #{view_generator_forward.1} parent=0 // pred_check
    _
  $region23: #{view_generator_forward.1} parent=0 // pred_check_branch
    %23 = sbr.rel (0) target = $region25
  $region24: #{view_generator_forward.1} parent=0 // pred_region
    _
  $region25: #{view_generator_forward.1} parent=0 // pred_fallthru
    _
  // Predicated region
  $region26: #{view_generator_forward.1} parent=0 // pred_check
    _
  $region27: #{view_generator_forward.1} parent=0 // pred_check_branch
    %25 = sbr.rel (0) target = $region29
  $region28: #{view_generator_forward.1} parent=0 // pred_region
    _
  $region29: #{view_generator_forward.1} parent=0 // pred_fallthru
    _
  %v26 = vld [vmem:[%s0] sm:$0xff]
  %v27 = vld [vmem:[%s0 + $0x8] sm:$0xff]
  %v28 = vld [vmem:[%s0 + $0x10] sm:$0xff]
  %v29 = vld [vmem:[%s0 + $0x18] sm:$0xff]
  %v30 = vld [vmem:[%s0 + $0x20] sm:$0xff]
  %v31 = vld [vmem:[%s0 + $0x28] sm:$0xff]
  %v32 = vld [vmem:[%s1] sm:$0xff]
  %v33 = vld [vmem:[%s1 + $0x8] sm:$0xff]
  %v34 = vld [vmem:[%s1 + $0x10] sm:$0xff]
  %v35 = vld [vmem:[%s1 + $0x18] sm:$0xff]
  %v36 = vld [vmem:[%s1 + $0x20] sm:$0xff]
  %v37 = vld [vmem:[%s1 + $0x28] sm:$0xff]
  %v38 = vld [vmem:[%s1 + $0x30] sm:$0xff]
  %v39 = vld [vmem:[%s1 + $0x38] sm:$0xff]
  %v40 = vld [vmem:[%s1 + $0x40] sm:$0xff]
  %v41 = vld [vmem:[%s1 + $0x48] sm:$0xff]
  %v42 = vld [vmem:[%s1 + $0x50] sm:$0xff]
  %v43 = vld [vmem:[%s1 + $0x58] sm:$0xff]
  %v44 = vld [vmem:[%s1 + $0x60] sm:$0xff]
  %v45 = vld [vmem:[%s1 + $0x68] sm:$0xff]
  %v46 = vld [vmem:[%s1 + $0x70] sm:$0xff]
  %v47 = vld [vmem:[%s1 + $0x78] sm:$0xff]
  %v48 = vld [vmem:[%s1 + $0x80] sm:$0xff]
  %v49 = vld [vmem:[%s1 + $0x88] sm:$0xff]
  %v50 = vld [vmem:[%s1 + $0x90] sm:$0xff]
  %v51 = vld [vmem:[%s1 + $0x98] sm:$0xff]
  %v52 = vld [vmem:[%s1 + $0xa0] sm:$0xff]
  %v53 = vld [vmem:[%s1 + $0xa8] sm:$0xff]
  %v54 = vld [vmem:[%s1 + $0xb0] sm:$0xff]
  %v55 = vld [vmem:[%s1 + $0xb8] sm:$0xff]
  %v56 = vld [vmem:[%s1 + $0xc0] sm:$0xff]
  %v57 = vld [vmem:[%s1 + $0xc8] sm:$0xff]
  %v58 = vld [vmem:[%s1 + $0xd0] sm:$0xff]
  %v59 = vld [vmem:[%s1 + $0xd8] sm:$0xff]
  %v60 = vld [vmem:[%s1 + $0xe0] sm:$0xff]
  %v61 = vld [vmem:[%s1 + $0xe8] sm:$0xff]
  %v62 = vld [vmem:[%s1 + $0xf0] sm:$0xff]
  %v63 = vld [vmem:[%s1 + $0xf8] sm:$0xff]
  %v64 = vld [vmem:[%s1 + $0x100] sm:$0xff]
  %v65 = vld [vmem:[%s1 + $0x108] sm:$0xff]
  %v66 = vld [vmem:[%s1 + $0x110] sm:$0xff]
  %v67 = vld [vmem:[%s1 + $0x118] sm:$0xff]
  %v68 = vld [vmem:[%s1 + $0x120] sm:$0xff]
  %v69 = vld [vmem:[%s1 + $0x128] sm:$0xff]
  %v70 = vld [vmem:[%s1 + $0x130] sm:$0xff]
  %v71 = vld [vmem:[%s1 + $0x138] sm:$0xff]
  %v72 = vld [vmem:[%s1 + $0x140] sm:$0xff]
  %v73 = vld [vmem:[%s1 + $0x148] sm:$0xff]
  %v74 = vld [vmem:[%s1 + $0x150] sm:$0xff]
  %v75 = vld [vmem:[%s1 + $0x158] sm:$0xff]
  %v76 = vld [vmem:[%s1 + $0x160] sm:$0xff]
  %v77 = vld [vmem:[%s1 + $0x168] sm:$0xff]
  %v78 = vld [vmem:[%s1 + $0x170] sm:$0xff]
  %v79 = vld [vmem:[%s1 + $0x178] sm:$0xff]
  %v80 = vld [vmem:[%s1 + $0x180] sm:$0xff]
  %v81 = vld [vmem:[%s1 + $0x188] sm:$0xff]
  %v82 = vld [vmem:[%s1 + $0x190] sm:$0xff]
  %v83 = vld [vmem:[%s1 + $0x198] sm:$0xff]
  %v84 = vld [vmem:[%s1 + $0x1a0] sm:$0xff]
  %v85 = vld [vmem:[%s1 + $0x1a8] sm:$0xff]
  %v86 = vld [vmem:[%s1 + $0x1b0] sm:$0xff]
  %v87 = vld [vmem:[%s1 + $0x1b8] sm:$0xff]
  %v88 = vld [vmem:[%s1 + $0x1c0] sm:$0xff]
  %v89 = vld [vmem:[%s1 + $0x1c8] sm:$0xff]
  %v90 = vld [vmem:[%s1 + $0x1d0] sm:$0xff]
  %v91 = vld [vmem:[%s1 + $0x1d8] sm:$0xff]
  %v92 = vld [vmem:[%s1 + $0x1e0] sm:$0xff]
  %v93 = vld [vmem:[%s1 + $0x1e8] sm:$0xff]
  %v94 = vld [vmem:[%s1 + $0x1f0] sm:$0xff]
  %v95 = vld [vmem:[%s1 + $0x1f8] sm:$0xff]
  %v96 = vld [vmem:[%s1 + $0x200] sm:$0xff]
  %v97 = vld [vmem:[%s1 + $0x208] sm:$0xff]
  %v98 = vld [vmem:[%s1 + $0x210] sm:$0xff]
  %v99 = vld [vmem:[%s1 + $0x218] sm:$0xff]
  %v100 = vld [vmem:[%s1 + $0x220] sm:$0xff]
  %v101 = vld [vmem:[%s1 + $0x228] sm:$0xff]
  %v102 = vld [vmem:[%s1 + $0x230] sm:$0xff]
  %v103 = vld [vmem:[%s1 + $0x238] sm:$0xff]
  %v104 = vld [vmem:[%s1 + $0x240] sm:$0xff]
  %v105 = vld [vmem:[%s1 + $0x248] sm:$0xff]
  %v106 = vld [vmem:[%s1 + $0x250] sm:$0xff]
  %v107 = vld [vmem:[%s1 + $0x258] sm:$0xff]
  %v108 = vld [vmem:[%s1 + $0x260] sm:$0xff]
  %v109 = vld [vmem:[%s1 + $0x268] sm:$0xff]
  %v110 = vld [vmem:[%s1 + $0x270] sm:$0xff]
  %v111 = vld [vmem:[%s1 + $0x278] sm:$0xff]
  %v112 = vld [vmem:[%s1 + $0x280] sm:$0xff]
  %v113 = vld [vmem:[%s1 + $0x288] sm:$0xff]
  %v114 = vld [vmem:[%s1 + $0x290] sm:$0xff]
  %v115 = vld [vmem:[%s1 + $0x298] sm:$0xff]
  %v116 = vld [vmem:[%s1 + $0x2a0] sm:$0xff]
  %v117 = vld [vmem:[%s1 + $0x2a8] sm:$0xff]
  %v118 = vld [vmem:[%s1 + $0x2b0] sm:$0xff]
  %v119 = vld [vmem:[%s1 + $0x2b8] sm:$0xff]
  %v120 = vld [vmem:[%s1 + $0x2c0] sm:$0xff]
  %v121 = vld [vmem:[%s1 + $0x2c8] sm:$0xff]
  %v122 = vld [vmem:[%s1 + $0x2d0] sm:$0xff]
  %v123 = vld [vmem:[%s1 + $0x2d8] sm:$0xff]
  %v124 = vld [vmem:[%s1 + $0x2e0] sm:$0xff]
  %v125 = vld [vmem:[%s1 + $0x2e8] sm:$0xff]
  %v126 = vld [vmem:[%s1 + $0x2f0] sm:$0xff]
  %v127 = vld [vmem:[%s1 + $0x2f8] sm:$0xff]
  %v128 = vld [vmem:[%s2] sm:$0x1]
  %v130 = vlaneseq
  %v131 = vshrl.u32 %v130, 7
  %v132 = vsub.s32 0, %v131
  %v133 = vrot.slane %v128, %v132
  %135 = vmatprep.subr.mxu0 0.0
  %136 = vmatpush1.msra.mxu0 %v32
  %137 = vmatprep.subr.mxu0 0.0
  %138 = vmatpush1.msra.mxu0 %v33
  %139 = vmatprep.subr.mxu0 0.0
  %140 = vmatpush1.msra.mxu0 %v34
  %141 = vmatprep.subr.mxu0 0.0
  %142 = vmatpush1.msra.mxu0 %v35
  %143 = vmatprep.subr.mxu0 0.0
  %144 = vmatpush1.msra.mxu0 %v36
  %145 = vmatprep.subr.mxu0 0.0
  %146 = vmatpush1.msra.mxu0 %v37
  %147 = vmatprep.subr.mxu0 0.0
  %148 = vmatpush1.msra.mxu0 %v38
  %149 = vmatprep.subr.mxu0 0.0
  %150 = vmatpush1.msra.mxu0 %v39
  %151 = vmatprep.subr.mxu0 0.0
  %152 = vmatpush1.msra.mxu0 %v40
  %153 = vmatprep.subr.mxu0 0.0
  %154 = vmatpush1.msra.mxu0 %v41
  %155 = vmatprep.subr.mxu0 0.0
  %156 = vmatpush1.msra.mxu0 %v42
  %157 = vmatprep.subr.mxu0 0.0
  %158 = vmatpush1.msra.mxu0 %v43
  %159 = vmatprep.subr.mxu0 0.0
  %160 = vmatpush1.msra.mxu0 %v44
  %161 = vmatprep.subr.mxu0 0.0
  %162 = vmatpush1.msra.mxu0 %v45
  %163 = vmatprep.subr.mxu0 0.0
  %164 = vmatpush1.msra.mxu0 %v46
  %165 = vmatprep.subr.mxu0 0.0
  %166 = vmatpush1.msra.mxu0 %v47
  %167 = vmatprep.subr.mxu0 0.0
  %168 = vmatpush1.msra.mxu0 %v48
  %169 = vmatprep.subr.mxu0 0.0
  %170 = vmatpush1.msra.mxu0 %v49
  %171 = vmatprep.subr.mxu0 0.0
  %172 = vmatpush1.msra.mxu0 %v50
  %173 = vmatprep.subr.mxu0 0.0
  %174 = vmatpush1.msra.mxu0 %v51
  %175 = vmatprep.subr.mxu0 0.0
  %176 = vmatpush1.msra.mxu0 %v52
  %177 = vmatprep.subr.mxu0 0.0
  %178 = vmatpush1.msra.mxu0 %v53
  %179 = vmatprep.subr.mxu0 0.0
  %180 = vmatpush1.msra.mxu0 %v54
  %181 = vmatprep.subr.mxu0 0.0
  %182 = vmatpush1.msra.mxu0 %v55
  %183 = vmatprep.subr.mxu0 0.0
  %184 = vmatpush1.msra.mxu0 %v56
  %185 = vmatprep.subr.mxu0 0.0
  %186 = vmatpush1.msra.mxu0 %v57
  %187 = vmatprep.subr.mxu0 0.0
  %188 = vmatpush1.msra.mxu0 %v58
  %189 = vmatprep.subr.mxu0 0.0
  %190 = vmatpush1.msra.mxu0 %v59
  %191 = vmatprep.subr.mxu0 0.0
  %192 = vmatpush1.msra.mxu0 %v60
  %193 = vmatprep.subr.mxu0 0.0
  %194 = vmatpush1.msra.mxu0 %v61
  %195 = vmatprep.subr.mxu0 0.0
  %196 = vmatpush1.msra.mxu0 %v62
  %197 = vmatprep.subr.mxu0 0.0
  %198 = vmatpush1.msra.mxu0 %v63
  %199 = vmatprep.mubr.f32.mxu0 %v27
  %200 = vmatmul.mubr.f32.gmra.mrb[0].mxu0 %v26
  %v201 = vpop.f32.mrb[0].mxu0
  %v202 = vadd.f32 %v133, %v201
  %v203 = vpop.f32.mrb[0].mxu0
  %204 = vdwg.mxu0
  %205 = vmatprep.subr.mxu0 0.0
  %206 = vmatpush1.msra.mxu0 %v64
  %207 = vmatprep.subr.mxu0 0.0
  %208 = vmatpush1.msra.mxu0 %v65
  %209 = vmatprep.subr.mxu0 0.0
  %210 = vmatpush1.msra.mxu0 %v66
  %211 = vmatprep.subr.mxu0 0.0
  %212 = vmatpush1.msra.mxu0 %v67
  %213 = vmatprep.subr.mxu0 0.0
  %214 = vmatpush1.msra.mxu0 %v68
  %215 = vmatprep.subr.mxu0 0.0
  %216 = vmatpush1.msra.mxu0 %v69
  %217 = vmatprep.subr.mxu0 0.0
  %218 = vmatpush1.msra.mxu0 %v70
  %219 = vmatprep.subr.mxu0 0.0
  %220 = vmatpush1.msra.mxu0 %v71
  %221 = vmatprep.subr.mxu0 0.0
  %222 = vmatpush1.msra.mxu0 %v72
  %223 = vmatprep.subr.mxu0 0.0
  %224 = vmatpush1.msra.mxu0 %v73
  %225 = vmatprep.subr.mxu0 0.0
  %226 = vmatpush1.msra.mxu0 %v74
  %227 = vmatprep.subr.mxu0 0.0
  %228 = vmatpush1.msra.mxu0 %v75
  %229 = vmatprep.subr.mxu0 0.0
  %230 = vmatpush1.msra.mxu0 %v76
  %231 = vmatprep.subr.mxu0 0.0
  %232 = vmatpush1.msra.mxu0 %v77
  %233 = vmatprep.subr.mxu0 0.0
  %234 = vmatpush1.msra.mxu0 %v78
  %235 = vmatprep.subr.mxu0 0.0
  %236 = vmatpush1.msra.mxu0 %v79
  %237 = vmatprep.subr.mxu0 0.0
  %238 = vmatpush1.msra.mxu0 %v80
  %239 = vmatprep.subr.mxu0 0.0
  %240 = vmatpush1.msra.mxu0 %v81
  %241 = vmatprep.subr.mxu0 0.0
  %242 = vmatpush1.msra.mxu0 %v82
  %243 = vmatprep.subr.mxu0 0.0
  %244 = vmatpush1.msra.mxu0 %v83
  %245 = vmatprep.subr.mxu0 0.0
  %246 = vmatpush1.msra.mxu0 %v84
  %247 = vmatprep.subr.mxu0 0.0
  %248 = vmatpush1.msra.mxu0 %v85
  %249 = vmatprep.subr.mxu0 0.0
  %250 = vmatpush1.msra.mxu0 %v86
  %251 = vmatprep.subr.mxu0 0.0
  %252 = vmatpush1.msra.mxu0 %v87
  %253 = vmatprep.subr.mxu0 0.0
  %254 = vmatpush1.msra.mxu0 %v88
  %255 = vmatprep.subr.mxu0 0.0
  %256 = vmatpush1.msra.mxu0 %v89
  %257 = vmatprep.subr.mxu0 0.0
  %258 = vmatpush1.msra.mxu0 %v90
  %259 = vmatprep.subr.mxu0 0.0
  %260 = vmatpush1.msra.mxu0 %v91
  %261 = vmatprep.subr.mxu0 0.0
  %262 = vmatpush1.msra.mxu0 %v92
  %263 = vmatprep.subr.mxu0 0.0
  %264 = vmatpush1.msra.mxu0 %v93
  %265 = vmatprep.subr.mxu0 0.0
  %266 = vmatpush1.msra.mxu0 %v94
  %267 = vmatprep.subr.mxu0 0.0
  %268 = vmatpush1.msra.mxu0 %v95
  %269 = vmatprep.mubr.f32.mxu0 %v29
  %270 = vmatmul.mubr.f32.gmra.mrb[0].mxu0 %v28
  %v271 = vpop.f32.mrb[0].mxu0
  %v272 = vadd.f32 %v202, %v271
  %v273 = vpop.f32.mrb[0].mxu0
  %274 = vdwg.mxu0
  %275 = vmatprep.subr.mxu0 0.0
  %276 = vmatpush1.msra.mxu0 %v96
  %277 = vmatprep.subr.mxu0 0.0
  %278 = vmatpush1.msra.mxu0 %v97
  %279 = vmatprep.subr.mxu0 0.0
  %280 = vmatpush1.msra.mxu0 %v98
  %281 = vmatprep.subr.mxu0 0.0
  %282 = vmatpush1.msra.mxu0 %v99
  %283 = vmatprep.subr.mxu0 0.0
  %284 = vmatpush1.msra.mxu0 %v100
  %285 = vmatprep.subr.mxu0 0.0
  %286 = vmatpush1.msra.mxu0 %v101
  %287 = vmatprep.subr.mxu0 0.0
  %288 = vmatpush1.msra.mxu0 %v102
  %289 = vmatprep.subr.mxu0 0.0
  %290 = vmatpush1.msra.mxu0 %v103
  %291 = vmatprep.subr.mxu0 0.0
  %292 = vmatpush1.msra.mxu0 %v104
  %293 = vmatprep.subr.mxu0 0.0
  %294 = vmatpush1.msra.mxu0 %v105
  %295 = vmatprep.subr.mxu0 0.0
  %296 = vmatpush1.msra.mxu0 %v106
  %297 = vmatprep.subr.mxu0 0.0
  %298 = vmatpush1.msra.mxu0 %v107
  %299 = vmatprep.subr.mxu0 0.0
  %300 = vmatpush1.msra.mxu0 %v108
  %301 = vmatprep.subr.mxu0 0.0
  %302 = vmatpush1.msra.mxu0 %v109
  %303 = vmatprep.subr.mxu0 0.0
  %304 = vmatpush1.msra.mxu0 %v110
  %305 = vmatprep.subr.mxu0 0.0
  %306 = vmatpush1.msra.mxu0 %v111
  %307 = vmatprep.subr.mxu0 0.0
  %308 = vmatpush1.msra.mxu0 %v112
  %309 = vmatprep.subr.mxu0 0.0
  %310 = vmatpush1.msra.mxu0 %v113
  %311 = vmatprep.subr.mxu0 0.0
  %312 = vmatpush1.msra.mxu0 %v114
  %313 = vmatprep.subr.mxu0 0.0
  %314 = vmatpush1.msra.mxu0 %v115
  %315 = vmatprep.subr.mxu0 0.0
  %316 = vmatpush1.msra.mxu0 %v116
  %317 = vmatprep.subr.mxu0 0.0
  %318 = vmatpush1.msra.mxu0 %v117
  %319 = vmatprep.subr.mxu0 0.0
  %320 = vmatpush1.msra.mxu0 %v118
  %321 = vmatprep.subr.mxu0 0.0
  %322 = vmatpush1.msra.mxu0 %v119
  %323 = vmatprep.subr.mxu0 0.0
  %324 = vmatpush1.msra.mxu0 %v120
  %325 = vmatprep.subr.mxu0 0.0
  %326 = vmatpush1.msra.mxu0 %v121
  %327 = vmatprep.subr.mxu0 0.0
  %328 = vmatpush1.msra.mxu0 %v122
  %329 = vmatprep.subr.mxu0 0.0
  %330 = vmatpush1.msra.mxu0 %v123
  %331 = vmatprep.subr.mxu0 0.0
  %332 = vmatpush1.msra.mxu0 %v124
  %333 = vmatprep.subr.mxu0 0.0
  %334 = vmatpush1.msra.mxu0 %v125
  %335 = vmatprep.subr.mxu0 0.0
  %336 = vmatpush1.msra.mxu0 %v126
  %337 = vmatprep.subr.mxu0 0.0
  %338 = vmatpush1.msra.mxu0 %v127
  %339 = vmatprep.mubr.f32.mxu0 %v31
  %340 = vmatmul.mubr.f32.gmra.mrb[0].mxu0 %v30
  %v341 = vpop.f32.mrb[0].mxu0
  %v342 = vadd.f32 %v272, %v341
  %v343 = vpop.f32.mrb[0].mxu0
  %344 = vdwg.mxu0
  %v345 = vld [vmem:[%s3] sm:$0xff]
  %v346 = vld [vmem:[%s3 + $0x8] sm:$0xff]
  %v347 = vld [vmem:[%s3 + $0x10] sm:$0xff]
  %v348 = vld [vmem:[%s3 + $0x18] sm:$0xff]
  %v349 = vld [vmem:[%s3 + $0x20] sm:$0xff]
  %v350 = vld [vmem:[%s3 + $0x28] sm:$0xff]
  %v351 = vld [vmem:[%s3 + $0x30] sm:$0xff]
  %v352 = vld [vmem:[%s3 + $0x38] sm:$0xff]
  %v353 = vld [vmem:[%s3 + $0x40] sm:$0xff]
  %v354 = vld [vmem:[%s3 + $0x48] sm:$0xff]
  %v355 = vld [vmem:[%s3 + $0x50] sm:$0xff]
  %v356 = vld [vmem:[%s3 + $0x58] sm:$0xff]
  %v357 = vld [vmem:[%s3 + $0x60] sm:$0xff]
  %v358 = vld [vmem:[%s3 + $0x68] sm:$0xff]
  %v359 = vld [vmem:[%s3 + $0x70] sm:$0xff]
  %v360 = vld [vmem:[%s3 + $0x78] sm:$0xff]
  %v361 = vld [vmem:[%s3 + $0x80] sm:$0xff]
  %v362 = vld [vmem:[%s3 + $0x88] sm:$0xff]
  %v363 = vld [vmem:[%s3 + $0x90] sm:$0xff]
  %v364 = vld [vmem:[%s3 + $0x98] sm:$0xff]
  %v365 = vld [vmem:[%s3 + $0xa0] sm:$0xff]
  %v366 = vld [vmem:[%s3 + $0xa8] sm:$0xff]
  %v367 = vld [vmem:[%s3 + $0xb0] sm:$0xff]
  %v368 = vld [vmem:[%s3 + $0xb8] sm:$0xff]
  %v369 = vld [vmem:[%s4] sm:$0x3f]
  %v371 = vlaneseq
  %v372 = vshrl.u32 %v371, 7
  %v373 = vsub.s32 0, %v372
  %v374 = vrot.slane %v369, %v373
  %v375 = vlaneseq
  %v376 = vshrl.u32 %v375, 7
  %v377 = vsub.s32 1, %v376
  %v378 = vrot.slane %v369, %v377
  %v379 = vlaneseq
  %v380 = vshrl.u32 %v379, 7
  %v381 = vsub.s32 2, %v380
  %v382 = vrot.slane %v369, %v381
  %v383 = vlaneseq
  %v384 = vshrl.u32 %v383, 7
  %v385 = vsub.s32 3, %v384
  %v386 = vrot.slane %v369, %v385
  %v387 = vlaneseq
  %v388 = vshrl.u32 %v387, 7
  %v389 = vsub.s32 4, %v388
  %v390 = vrot.slane %v369, %v389
  %v391 = vlaneseq
  %v392 = vshrl.u32 %v391, 7
  %v393 = vsub.s32 5, %v392
  %v394 = vrot.slane %v369, %v393
  %vm401 = vcmask 261120
  %v403 = vsel %vm401, %v342, 0
  %405 = vmatprep.subr.mxu0 %v346
  %406 = vmatpush1.msra.mxu0 %v345
  %407 = vmatprep.subr.mxu0 %v352
  %408 = vmatpush1.msra.mxu0 %v351
  %409 = vmatprep.subr.mxu0 %v358
  %410 = vmatpush1.msra.mxu0 %v357
  %411 = vmatprep.subr.mxu0 %v364
  %412 = vmatpush1.msra.mxu0 %v363
  %413 = vmatprep.subr.mxu0 0.0
  %414 = vmatpush1.msra.mxu0 0.0
  %415 = vmatprep.subr.mxu0 0.0
  %416 = vmatpush1.msra.mxu0 0.0
  %417 = vmatprep.subr.mxu0 0.0
  %418 = vmatpush1.msra.mxu0 0.0
  %419 = vmatprep.subr.mxu0 0.0
  %420 = vmatpush1.msra.mxu0 0.0
  %421 = vmatprep.subr.mxu0 0.0
  %422 = vmatpush1.msra.mxu0 0.0
  %423 = vmatprep.subr.mxu0 0.0
  %424 = vmatpush1.msra.mxu0 0.0
  %425 = vmatprep.subr.mxu0 0.0
  %426 = vmatpush1.msra.mxu0 0.0
  %427 = vmatprep.subr.mxu0 0.0
  %428 = vmatpush1.msra.mxu0 0.0
  %429 = vmatprep.subr.mxu0 0.0
  %430 = vmatpush1.msra.mxu0 0.0
  %431 = vmatprep.subr.mxu0 0.0
  %432 = vmatpush1.msra.mxu0 0.0
  %433 = vmatprep.subr.mxu0 0.0
  %434 = vmatpush1.msra.mxu0 0.0
  %435 = vmatprep.subr.mxu0 0.0
  %436 = vmatpush1.msra.mxu0 0.0
  %437 = vmatprep.subr.mxu0 0.0
  %438 = vmatpush1.msra.mxu0 0.0
  %439 = vmatprep.subr.mxu0 0.0
  %440 = vmatpush1.msra.mxu0 0.0
  %441 = vmatprep.subr.mxu0 0.0
  %442 = vmatpush1.msra.mxu0 0.0
  %443 = vmatprep.subr.mxu0 0.0
  %444 = vmatpush1.msra.mxu0 0.0
  %445 = vmatprep.subr.mxu0 0.0
  %446 = vmatpush1.msra.mxu0 0.0
  %447 = vmatprep.subr.mxu0 0.0
  %448 = vmatpush1.msra.mxu0 0.0
  %449 = vmatprep.subr.mxu0 0.0
  %450 = vmatpush1.msra.mxu0 0.0
  %451 = vmatprep.subr.mxu0 0.0
  %452 = vmatpush1.msra.mxu0 0.0
  %453 = vmatprep.subr.mxu0 0.0
  %454 = vmatpush1.msra.mxu0 0.0
  %455 = vmatprep.subr.mxu0 0.0
  %456 = vmatpush1.msra.mxu0 0.0
  %457 = vmatprep.subr.mxu0 0.0
  %458 = vmatpush1.msra.mxu0 0.0
  %459 = vmatprep.subr.mxu0 0.0
  %460 = vmatpush1.msra.mxu0 0.0
  %461 = vmatprep.subr.mxu0 0.0
  %462 = vmatpush1.msra.mxu0 0.0
  %463 = vmatprep.subr.mxu0 0.0
  %464 = vmatpush1.msra.mxu0 0.0
  %465 = vmatprep.subr.mxu0 0.0
  %466 = vmatpush1.msra.mxu0 0.0
  %467 = vmatprep.subr.mxu0 0.0
  %468 = vmatpush1.msra.mxu0 0.0
  %469 = vmatprep.mubr.f32.mxu0 0.0
  %470 = vmatmul.mubr.f32.gmra.mrb[0].mxu0 %v403
  %v471 = vpop.f32.mrb[0].mxu0
  %v472 = vadd.f32 %v374, %v471
  %v473 = vpop.f32.mrb[0].mxu0
  %v474 = vadd.f32 %v378, %v473
  %475 = vdwg.mxu0
  %476 = vmatprep.subr.mxu0 %v348
  %477 = vmatpush1.msra.mxu0 %v347
  %478 = vmatprep.subr.mxu0 %v354
  %479 = vmatpush1.msra.mxu0 %v353
  %480 = vmatprep.subr.mxu0 %v360
  %481 = vmatpush1.msra.mxu0 %v359
  %482 = vmatprep.subr.mxu0 %v366
  %483 = vmatpush1.msra.mxu0 %v365
  %484 = vmatprep.subr.mxu0 0.0
  %485 = vmatpush1.msra.mxu0 0.0
  %486 = vmatprep.subr.mxu0 0.0
  %487 = vmatpush1.msra.mxu0 0.0
  %488 = vmatprep.subr.mxu0 0.0
  %489 = vmatpush1.msra.mxu0 0.0
  %490 = vmatprep.subr.mxu0 0.0
  %491 = vmatpush1.msra.mxu0 0.0
  %492 = vmatprep.subr.mxu0 0.0
  %493 = vmatpush1.msra.mxu0 0.0
  %494 = vmatprep.subr.mxu0 0.0
  %495 = vmatpush1.msra.mxu0 0.0
  %496 = vmatprep.subr.mxu0 0.0
  %497 = vmatpush1.msra.mxu0 0.0
  %498 = vmatprep.subr.mxu0 0.0
  %499 = vmatpush1.msra.mxu0 0.0
  %500 = vmatprep.subr.mxu0 0.0
  %501 = vmatpush1.msra.mxu0 0.0
  %502 = vmatprep.subr.mxu0 0.0
  %503 = vmatpush1.msra.mxu0 0.0
  %504 = vmatprep.subr.mxu0 0.0
  %505 = vmatpush1.msra.mxu0 0.0
  %506 = vmatprep.subr.mxu0 0.0
  %507 = vmatpush1.msra.mxu0 0.0
  %508 = vmatprep.subr.mxu0 0.0
  %509 = vmatpush1.msra.mxu0 0.0
  %510 = vmatprep.subr.mxu0 0.0
  %511 = vmatpush1.msra.mxu0 0.0
  %512 = vmatprep.subr.mxu0 0.0
  %513 = vmatpush1.msra.mxu0 0.0
  %514 = vmatprep.subr.mxu0 0.0
  %515 = vmatpush1.msra.mxu0 0.0
  %516 = vmatprep.subr.mxu0 0.0
  %517 = vmatpush1.msra.mxu0 0.0
  %518 = vmatprep.subr.mxu0 0.0
  %519 = vmatpush1.msra.mxu0 0.0
  %520 = vmatprep.subr.mxu0 0.0
  %521 = vmatpush1.msra.mxu0 0.0
  %522 = vmatprep.subr.mxu0 0.0
  %523 = vmatpush1.msra.mxu0 0.0
  %524 = vmatprep.subr.mxu0 0.0
  %525 = vmatpush1.msra.mxu0 0.0
  %526 = vmatprep.subr.mxu0 0.0
  %527 = vmatpush1.msra.mxu0 0.0
  %528 = vmatprep.subr.mxu0 0.0
  %529 = vmatpush1.msra.mxu0 0.0
  %530 = vmatprep.subr.mxu0 0.0
  %531 = vmatpush1.msra.mxu0 0.0
  %532 = vmatprep.subr.mxu0 0.0
  %533 = vmatpush1.msra.mxu0 0.0
  %534 = vmatprep.subr.mxu0 0.0
  %535 = vmatpush1.msra.mxu0 0.0
  %536 = vmatprep.subr.mxu0 0.0
  %537 = vmatpush1.msra.mxu0 0.0
  %538 = vmatprep.subr.mxu0 0.0
  %539 = vmatpush1.msra.mxu0 0.0
  %540 = vmatprep.mubr.f32.mxu0 0.0
  %541 = vmatmul.mubr.f32.gmra.mrb[0].mxu0 %v403
  %v542 = vpop.f32.mrb[0].mxu0
  %v543 = vadd.f32 %v382, %v542
  %v544 = vpop.f32.mrb[0].mxu0
  %v545 = vadd.f32 %v386, %v544
  %546 = vdwg.mxu0
  %547 = vmatprep.subr.mxu0 %v350
  %548 = vmatpush1.msra.mxu0 %v349
  %549 = vmatprep.subr.mxu0 %v356
  %550 = vmatpush1.msra.mxu0 %v355
  %551 = vmatprep.subr.mxu0 %v362
  %552 = vmatpush1.msra.mxu0 %v361
  %553 = vmatprep.subr.mxu0 %v368
  %554 = vmatpush1.msra.mxu0 %v367
  %555 = vmatprep.subr.mxu0 0.0
  %556 = vmatpush1.msra.mxu0 0.0
  %557 = vmatprep.subr.mxu0 0.0
  %558 = vmatpush1.msra.mxu0 0.0
  %559 = vmatprep.subr.mxu0 0.0
  %560 = vmatpush1.msra.mxu0 0.0
  %561 = vmatprep.subr.mxu0 0.0
  %562 = vmatpush1.msra.mxu0 0.0
  %563 = vmatprep.subr.mxu0 0.0
  %564 = vmatpush1.msra.mxu0 0.0
  %565 = vmatprep.subr.mxu0 0.0
  %566 = vmatpush1.msra.mxu0 0.0
  %567 = vmatprep.subr.mxu0 0.0
  %568 = vmatpush1.msra.mxu0 0.0
  %569 = vmatprep.subr.mxu0 0.0
  %570 = vmatpush1.msra.mxu0 0.0
  %571 = vmatprep.subr.mxu0 0.0
  %572 = vmatpush1.msra.mxu0 0.0
  %573 = vmatprep.subr.mxu0 0.0
  %574 = vmatpush1.msra.mxu0 0.0
  %575 = vmatprep.subr.mxu0 0.0
  %576 = vmatpush1.msra.mxu0 0.0
  %577 = vmatprep.subr.mxu0 0.0
  %578 = vmatpush1.msra.mxu0 0.0
  %579 = vmatprep.subr.mxu0 0.0
  %580 = vmatpush1.msra.mxu0 0.0
  %581 = vmatprep.subr.mxu0 0.0
  %582 = vmatpush1.msra.mxu0 0.0
  %583 = vmatprep.subr.mxu0 0.0
  %584 = vmatpush1.msra.mxu0 0.0
  %585 = vmatprep.subr.mxu0 0.0
  %586 = vmatpush1.msra.mxu0 0.0
  %587 = vmatprep.subr.mxu0 0.0
  %588 = vmatpush1.msra.mxu0 0.0
  %589 = vmatprep.subr.mxu0 0.0
  %590 = vmatpush1.msra.mxu0 0.0
  %591 = vmatprep.subr.mxu0 0.0
  %592 = vmatpush1.msra.mxu0 0.0
  %593 = vmatprep.subr.mxu0 0.0
  %594 = vmatpush1.msra.mxu0 0.0
  %595 = vmatprep.subr.mxu0 0.0
  %596 = vmatpush1.msra.mxu0 0.0
  %597 = vmatprep.subr.mxu0 0.0
  %598 = vmatpush1.msra.mxu0 0.0
  %599 = vmatprep.subr.mxu0 0.0
  %600 = vmatpush1.msra.mxu0 0.0
  %601 = vmatprep.subr.mxu0 0.0
  %602 = vmatpush1.msra.mxu0 0.0
  %603 = vmatprep.subr.mxu0 0.0
  %604 = vmatpush1.msra.mxu0 0.0
  %605 = vmatprep.subr.mxu0 0.0
  %606 = vmatpush1.msra.mxu0 0.0
  %607 = vmatprep.subr.mxu0 0.0
  %608 = vmatpush1.msra.mxu0 0.0
  %609 = vmatprep.subr.mxu0 0.0
  %610 = vmatpush1.msra.mxu0 0.0
  %611 = vmatprep.mubr.f32.mxu0 0.0
  %612 = vmatmul.mubr.f32.gmra.mrb[0].mxu0 %v403
  %v613 = vpop.f32.mrb[0].mxu0
  %v614 = vadd.f32 %v390, %v613
  %v615 = vpop.f32.mrb[0].mxu0
  %v616 = vadd.f32 %v394, %v615
  %617 = vdwg.mxu0
  %v618 = vtanh.pop %v472
  %v619 = vtanh.pop %v474
  %v620 = vtanh.pop %v543
  %v621 = vtanh.pop %v545
  %v622 = vtanh.pop %v614
  %v623 = vtanh.pop %v616
  %v624 = vld [vmem:[%s5] sm:$0x3f]
  %v626 = vlaneseq
  %v627 = vshrl.u32 %v626, 7
  %v628 = vsub.s32 0, %v627
  %v629 = vrot.slane %v624, %v628
  %v630 = vlaneseq
  %v631 = vshrl.u32 %v630, 7
  %v632 = vsub.s32 1, %v631
  %v633 = vrot.slane %v624, %v632
  %v634 = vlaneseq
  %v635 = vshrl.u32 %v634, 7
  %v636 = vsub.s32 2, %v635
  %v637 = vrot.slane %v624, %v636
  %v638 = vlaneseq
  %v639 = vshrl.u32 %v638, 7
  %v640 = vsub.s32 3, %v639
  %v641 = vrot.slane %v624, %v640
  %v642 = vlaneseq
  %v643 = vshrl.u32 %v642, 7
  %v644 = vsub.s32 4, %v643
  %v645 = vrot.slane %v624, %v644
  %v646 = vlaneseq
  %v647 = vshrl.u32 %v646, 7
  %v648 = vsub.s32 5, %v647
  %v649 = vrot.slane %v624, %v648
  %v656 = vmul.f32 %v618, %v629
  %v657 = vmul.f32 %v619, %v633
  %v658 = vmul.f32 %v620, %v637
  %v659 = vmul.f32 %v621, %v641
  %v660 = vmul.f32 %v622, %v645
  %v661 = vmul.f32 %v623, %v649
  %v662 = vld [vmem:[%s6] sm:$0x3f]
  %v664 = vlaneseq
  %v665 = vshrl.u32 %v664, 7
  %v666 = vsub.s32 0, %v665
  %v667 = vrot.slane %v662, %v666
  %v668 = vlaneseq
  %v669 = vshrl.u32 %v668, 7
  %v670 = vsub.s32 1, %v669
  %v671 = vrot.slane %v662, %v670
  %v672 = vlaneseq
  %v673 = vshrl.u32 %v672, 7
  %v674 = vsub.s32 2, %v673
  %v675 = vrot.slane %v662, %v674
  %v676 = vlaneseq
  %v677 = vshrl.u32 %v676, 7
  %v678 = vsub.s32 3, %v677
  %v679 = vrot.slane %v662, %v678
  %v680 = vlaneseq
  %v681 = vshrl.u32 %v680, 7
  %v682 = vsub.s32 4, %v681
  %v683 = vrot.slane %v662, %v682
  %v684 = vlaneseq
  %v685 = vshrl.u32 %v684, 7
  %v686 = vsub.s32 5, %v685
  %v687 = vrot.slane %v662, %v686
  %v694 = vadd.f32 %v656, %v667
  %v695 = vadd.f32 %v657, %v671
  %v696 = vadd.f32 %v658, %v675
  %v697 = vadd.f32 %v659, %v679
  %v698 = vadd.f32 %v660, %v683
  %v699 = vadd.f32 %v661, %v687
  %700 = vst [vmem:[%s7] sm:$0xff] %v694
  %701 = vst [vmem:[%s7 + $0x8] sm:$0xff] %v695
  %702 = vst [vmem:[%s7 + $0x10] sm:$0xff] %v696
  %703 = vst [vmem:[%s7 + $0x18] sm:$0xff] %v697
  %704 = vst [vmem:[%s7 + $0x20] sm:$0xff] %v698
  %705 = vst [vmem:[%s7 + $0x28] sm:$0xff] %v699
  // Predicated region
  $region30: #{view_generator_forward.1} parent=0 // pred_check
    _
  $region31: #{view_generator_forward.1} parent=0 // pred_check_branch
    %707 = sbr.rel (0) target = $region33
  $region32: #{view_generator_forward.1} parent=0 // pred_region
    _
  $region33: #{view_generator_forward.1} parent=0 // pred_fallthru
    _
  // Predicated region
  $region34: #{view_generator_forward.1} parent=0 // pred_check
    _
  $region35: #{view_generator_forward.1} parent=0 // pred_check_branch
    %709 = sbr.rel (0) target = $region37
  $region36: #{view_generator_forward.1} parent=0 // pred_region
    _
  $region37: #{view_generator_forward.1} parent=0 // pred_fallthru
    _

</llo_original>
